<compile_context>
chip_gen: v6e
topology: v6e:2x2x1
jax: 0.10.0
libtpu: 0.0.40
codegen_flags: <defaults>
</compile_context>

<pallas_src>
import functools

import jax
import jax.numpy as jnp
from jax.experimental import pallas as pl
from jax.experimental.pallas import tpu as pltpu


def _round_up(x, m):
    return (x + m - 1) // m * m


def _vmem_estimate(TL, C_in, C_out, K, pad16, has_downsample):
    """Approximate per-call VMEM footprint (pipeline buffers + scratch), bytes."""
    bf, f4 = 2, 4
    est = 2 * TL * C_in * bf                      # x tile (bf16), double buffered
    est += 2 * TL * C_out * f4                    # out tile (f32), double buffered
    est += (pad16 + TL) * (C_in + C_out) * bf     # bf16 window scratches
    w_elems = K * C_in * C_out + K * C_out * C_out
    if has_downsample:
        w_elems += C_in * C_out
    est += 2 * w_elems * bf                       # weights (constant idx, 2 bufs)
    est += 2 * 3 * C_out * f4                     # biases
    return est


def _pick_time_tile(L, C_in, C_out, K, pad16, has_downsample, budget=20 << 20):
    """Largest time tile that divides L and fits the VMEM budget."""
    def fits(t):
        return _vmem_estimate(t, C_in, C_out, K, pad16, has_downsample) <= budget

    if fits(L):
        return L            # single tile: no halo carry, no per-step overhead
    best = fallback = None
    t = 16
    while t <= L // 2:
        if L % t == 0 and t >= pad16:
            fallback = t
            if fits(t):
                best = t
        t += 16
    if best is not None:
        return best
    # No fitting divisor (e.g. L has no multiple-of-16 divisors): still correct,
    # may spill / need a larger vmem limit.
    return fallback if fallback is not None else L


def _temporal_block_kernel(x_ref, w1_ref, b1_ref, w2_ref, b2_ref, *rest,
                           K, dilation, pad, pad16, TL, has_downsample,
                           use_im2col):
    # x_ref  : (TL, C_in) bf16           current time tile, one batch element
    # w1_ref : (K*C_in, C_out) bf16 if use_im2col else (K, C_in, C_out) bf16
    # w2_ref : (K*C_out, C_out) bf16 if use_im2col else (K, C_out, C_out) bf16
    # b*_ref : (1, C_out) f32
    # rest   : [wd_ref (C_in, C_out) bf16, bd_ref (1, C_out) f32,]
    #          out_ref (TL, C_out) f32,
    #          xw_ref (pad16+TL, C_in) bf16, h1w_ref (pad16+TL, C_out) bf16
    if has_downsample:
        wd_ref, bd_ref, out_ref, xw_ref, h1w_ref = rest
    else:
        out_ref, xw_ref, h1w_ref = rest

    j = pl.program_id(1)               # time-tile index (innermost, sequential)
    d = dilation
    C_in = x_ref.shape[-1]
    C_out = b1_ref.shape[-1]

    # ---- causal left-halo management (persistent bf16 VMEM windows) ----------
    # Rows [0, pad16) hold the last pad16 timesteps *before* this tile: zeros at
    # the first tile of a sequence, otherwise the tail of the previous tile,
    # carried across the sequential "arbitrary" time axis.  All stores start at
    # multiples of 16 sublanes, so bf16 packed stores stay aligned.
    @pl.when(j == 0)
    def _():
        xw_ref[0:pad16, :] = jnp.zeros((pad16, C_in), jnp.bfloat16)
        h1w_ref[0:pad16, :] = jnp.zeros((pad16, C_out), jnp.bfloat16)

    @pl.when(j > 0)
    def _():
        # Non-overlapping copy: wrapper asserts TL >= pad16 whenever tiled.
        xw_ref[0:pad16, :] = xw_ref[TL:TL + pad16, :]
        h1w_ref[0:pad16, :] = h1w_ref[TL:TL + pad16, :]

    x_tile = x_ref[...]                                 # (TL, C_in) bf16
    xw_ref[pad16:pad16 + TL, :] = x_tile

    def causal_conv(win_ref, w_ref, b_ref):
        # tap k contracts window rows [off0 + k*d, off0 + k*d + TL) with w[k]
        off0 = pad16 - pad
        if use_im2col:
            # Single deep MXU pass: concat the K shifted bf16 windows along the
            # lane dim (each operand is a whole number of 128-lane vregs wide)
            # and contract against the pre-flattened (K*C, C_out) weight.
            taps = [win_ref[off0 + k * d: off0 + k * d + TL, :] for k in range(K)]
            col = taps[0] if K == 1 else jnp.concatenate(taps, axis=-1)
            acc = jnp.dot(col, w_ref[...], preferred_element_type=jnp.float32)
        else:
            acc = jnp.dot(win_ref[off0:off0 + TL, :], w_ref[0],
                          preferred_element_type=jnp.float32)
            for k in range(1, K):
                off = off0 + k * d
                acc = acc + jnp.dot(win_ref[off:off + TL, :], w_ref[k],
                                    preferred_element_type=jnp.float32)
        return acc + b_ref[...]

    # ---- conv1 (causal dilated) + bias + ReLU --------------------------------
    h1 = jnp.maximum(causal_conv(xw_ref, w1_ref, b1_ref), 0.0)
    # TODO(synk): training-mode dropout mask (dropout1/2 are identity at inference).
    h1w_ref[pad16:pad16 + TL, :] = h1.astype(jnp.bfloat16)

    # ---- conv2 (causal dilated) + bias + ReLU --------------------------------
    h2 = jnp.maximum(causal_conv(h1w_ref, w2_ref, b2_ref), 0.0)

    # ---- residual (1x1 conv if n_inputs != n_outputs) + final ReLU -----------
    if has_downsample:
        res = jnp.dot(x_tile, wd_ref[...],
                      preferred_element_type=jnp.float32) + bd_ref[...]
    else:
        res = x_tile.astype(jnp.float32)
    out_ref[...] = jnp.maximum(h2 + res, 0.0).astype(out_ref.dtype)


def temporal_block(x, params, *, kernel_size, stride, dilation, padding,
                   time_tile=None, channels_last=False):
    """TemporalBlock forward.

    x: (N, C_in, L) float32 (PyTorch NCL) by default, or (N, L, C_in) if
    channels_last=True (skips both wrapper-side HBM transpose passes).

    params (PyTorch tensor layouts):
      w1: (C_out, C_in, K)   b1: (C_out,)
      w2: (C_out, C_out, K)  b2: (C_out,)
      wd: (C_out, C_in, 1) or None (1x1 downsample)   bd: (C_out,) or None
    Returns f32 in the same layout convention as the input.
    """
    assert stride == 1, "TCN TemporalBlock uses stride=1"
    assert padding == (kernel_size - 1) * dilation, \
        "standard causal TCN padding required"
    assert padding >= 1, "Chomp1d(0) is degenerate in the reference module"

    if channels_last:
        N, L, C_in = x.shape
        x_nlc = x.astype(jnp.bfloat16)
    else:
        N, C_in, L = x.shape
        # single NCL->NLC transpose fused with the bf16 cast; the causal zero
        # padding is handled in-kernel, so there is no jnp.pad HBM round trip.
        x_nlc = jnp.transpose(x, (0, 2, 1)).astype(jnp.bfloat16)

    K, pad = kernel_size, padding
    w1, b1, w2, b2 = params["w1"], params["b1"], params["w2"], params["b2"]
    wd, bd = params.get("wd"), params.get("bd")
    C_out = w1.shape[0]
    has_downsample = wd is not None
    if not has_downsample:
        assert C_in == C_out, \
            "identity residual requires n_inputs == n_outputs (else pass wd/bd)"

    pad16 = _round_up(pad, 16)        # bf16-sublane-aligned halo

    # time tile: largest tile dividing L that fits the VMEM budget
    if time_tile is None:
        TL = _pick_time_tile(L, C_in, C_out, K, pad16, has_downsample)
    else:
        TL = time_tile
    assert L % TL == 0, "time_tile must divide L (no ragged-tail path)"
    JT = L // TL
    if JT > 1:
        assert TL % 16 == 0, "tiled time axis must be a multiple of 16 rows"
        assert TL >= pad16, "halo carry requires TL >= pad16 (non-overlap copy)"

    # im2col only when every concat operand is a whole number of 128-lane vregs
    # wide (conv1 operands are C_in lanes, conv2 operands are C_out lanes);
    # smaller / unaligned channel counts are HBM-bound and keep the per-tap path.
    use_im2col = K > 1 and (C_in % 128 == 0) and (C_out % 128 == 0)

    # weights: torch (C_out, C_in, K) -> (K, C_in, C_out), bf16 MXU operands;
    # flattened to (K*C, C_out) for the single im2col matmul.
    w1k = jnp.transpose(w1, (2, 1, 0)).astype(jnp.bfloat16)
    w2k = jnp.transpose(w2, (2, 1, 0)).astype(jnp.bfloat16)
    if use_im2col:
        w1k = w1k.reshape(K * C_in, C_out)
        w2k = w2k.reshape(K * C_out, C_out)
    b1k = b1.reshape(1, C_out).astype(jnp.float32)
    b2k = b2.reshape(1, C_out).astype(jnp.float32)

    def const_spec(shape):
        return pl.BlockSpec(shape, lambda n, j: (0,) * len(shape))

    args = [x_nlc, w1k, b1k, w2k, b2k]
    in_specs = [
        pl.BlockSpec((None, TL, C_in), lambda n, j: (n, j, 0)),
        const_spec(w1k.shape),
        const_spec((1, C_out)),
        const_spec(w2k.shape),
        const_spec((1, C_out)),
    ]
    if has_downsample:
        wdk = jnp.transpose(wd[:, :, 0], (1, 0)).astype(jnp.bfloat16)  # (C_in, C_out)
        bdk = bd.reshape(1, C_out).astype(jnp.float32)
        args += [wdk, bdk]
        in_specs += [const_spec((C_in, C_out)), const_spec((1, C_out))]
    # NOTE: the constant-index weight specs are never re-DMA'd but still get two
    # VMEM buffers each; pl.Buffered(1) would reclaim one buffer apiece and is
    # left off only to keep lowering risk at zero across generations.

    kern = functools.partial(_temporal_block_kernel, K=K, dilation=dilation,
                             pad=pad, pad16=pad16, TL=TL,
                             has_downsample=has_downsample,
                             use_im2col=use_im2col)

    est = _vmem_estimate(TL, C_in, C_out, K, pad16, has_downsample)
    vmem_limit = int(min(max(32 << 20, est + (8 << 20)), 64 << 20))

    out_nlc = pl.pallas_call(
        kern,
        out_shape=jax.ShapeDtypeStruct((N, L, C_out), jnp.float32),
        grid_spec=pltpu.PrefetchScalarGridSpec(
            num_scalar_prefetch=0,
            grid=(N, JT),                        # time tiles innermost (halo carry)
            in_specs=in_specs,
            out_specs=pl.BlockSpec((None, TL, C_out), lambda n, j: (n, j, 0)),
            scratch_shapes=[pltpu.VMEM((pad16 + TL, C_in), jnp.bfloat16),
                            pltpu.VMEM((pad16 + TL, C_out), jnp.bfloat16)],
        ),
        compiler_params=pltpu.CompilerParams(
            dimension_semantics=("parallel", "arbitrary"),
            vmem_limit_bytes=vmem_limit),
    )(*args)

    if channels_last:
        return out_nlc
    return jnp.transpose(out_nlc, (0, 2, 1))                 # NLC -> NCL


# ---------------------------- pure-JAX reference ------------------------------
def _ref_temporal_block(x_ncl, params, kernel_size, dilation, padding):
    """Mirrors the kernel's mixed precision: bf16 operands, f32 accumulation."""
    bf = lambda a: a.astype(jnp.bfloat16).astype(jnp.float32)
    K, pad = kernel_size, padding
    w1, b1, w2, b2 = params["w1"], params["b1"], params["w2"], params["b2"]
    wd, bd = params.get("wd"), params.get("bd")

    def causal_conv(h_nlc, w_oik, b):
        N, L, _ = h_nlc.shape
        hp = jnp.pad(bf(h_nlc), ((0, 0), (pad, 0), (0, 0)))
        acc = jnp.zeros((N, L, w_oik.shape[0]), jnp.float32)
        for k in range(K):
            acc = acc + jnp.einsum("nlc,oc->nlo",
                                   hp[:, k * dilation:k * dilation + L, :],
                                   bf(w_oik[:, :, k]))
        return acc + b[None, None, :]

    x_nlc = jnp.transpose(x_ncl, (0, 2, 1)).astype(jnp.float32)
    h1 = jnp.maximum(causal_conv(x_nlc, w1, b1), 0.0)
    h2 = jnp.maximum(causal_conv(h1, w2, b2), 0.0)
    if wd is not None:
        res = jnp.einsum("nlc,oc->nlo", bf(x_nlc), bf(wd[:, :, 0])) + bd[None, None, :]
    else:
        res = bf(x_nlc)
    return jnp.transpose(jnp.maximum(h2 + res, 0.0), (0, 2, 1))


if __name__ == "__main__":
    key = jax.random.PRNGKey(0)

    def make_params(k, c_in, c_out, ks, with_downsample):
        ks_ = jax.random.split(k, 6)
        p = {
            "w1": 0.01 * jax.random.normal(ks_[0], (c_out, c_in, ks), jnp.float32),
            "b1": 0.05 * jax.random.normal(ks_[1], (c_out,), jnp.float32),
            "w2": 0.01 * jax.random.normal(ks_[2], (c_out, c_out, ks), jnp.float32),
            "b2": 0.05 * jax.random.normal(ks_[3], (c_out,), jnp.float32),
            "wd": None, "bd": None,
        }
        if with_downsample:
            p["wd"] = 0.01 * jax.random.normal(ks_[4], (c_out, c_in, 1), jnp.float32)
            p["bd"] = 0.05 * jax.random.normal(ks_[5], (c_out,), jnp.float32)
        return p

    k1, k2, k3, kx1, kx2, kx3 = jax.random.split(key, 6)

    # --- test 1: downsample path (n_inputs != n_outputs), single time tile,
    #     small unaligned channels -> per-tap conv path ------------------------
    N, C_in, C_out, L = 2, 4, 8, 16
    K, dil = 3, 2
    pad = (K - 1) * dil
    params1 = make_params(k1, C_in, C_out, K, with_downsample=True)
    x1 = jax.random.normal(kx1, (N, C_in, L), jnp.float32)
    y1 = jax.block_until_ready(
        temporal_block(x1, params1, kernel_size=K, stride=1,
                       dilation=dil, padding=pad))
    y1_ref = _ref_temporal_block(x1, params1, K, dil, pad)
    assert y1.shape == (N, C_out, L)
    assert bool(jnp.allclose(y1, y1_ref, atol=1e-3, rtol=1e-3)), \
        float(jnp.max(jnp.abs(y1 - y1_ref)))

    # channels-last API (skips both wrapper-side HBM transpose passes)
    y1_cl = jax.block_until_ready(
        temporal_block(jnp.transpose(x1, (0, 2, 1)), params1, kernel_size=K,
                       stride=1, dilation=dil, padding=pad, channels_last=True))
    assert bool(jnp.allclose(jnp.transpose(y1_cl, (0, 2, 1)), y1,
                             atol=1e-6, rtol=0.0))

    # --- test 2: identity residual, multiple time tiles (exercises the
    #     cross-tile causal-halo carry), per-tap path --------------------------
    N2, C2, L2 = 2, 8, 256
    K2, dil2 = 3, 4
    pad2 = (K2 - 1) * dil2
    params2 = make_params(k2, C2, C2, K2, with_downsample=False)
    x2 = jax.random.normal(kx2, (N2, C2, L2), jnp.float32)
    y2 = jax.block_until_ready(
        temporal_block(x2, params2, kernel_size=K2, stride=1,
                       dilation=dil2, padding=pad2, time_tile=128))
    y2_ref = _ref_temporal_block(x2, params2, K2, dil2, pad2)
    assert y2.shape == (N2, C2, L2)
    assert bool(jnp.allclose(y2, y2_ref, atol=1e-3, rtol=1e-3)), \
        float(jnp.max(jnp.abs(y2 - y2_ref)))

    # --- test 3: lane-aligned channels (C=128) -> fused im2col MXU path,
    #     with halo carry across time tiles ------------------------------------
    N3, C3, L3 = 1, 128, 256
    K3, dil3 = 3, 2
    pad3 = (K3 - 1) * dil3
    params3 = make_params(k3, C3, C3, K3, with_downsample=False)
    x3 = jax.random.normal(kx3, (N3, C3, L3), jnp.float32)
    y3 = jax.block_until_ready(
        temporal_block(x3, params3, kernel_size=K3, stride=1,
                       dilation=dil3, padding=pad3, time_tile=128))
    y3_ref = _ref_temporal_block(x3, params3, K3, dil3, pad3)
    assert y3.shape == (N3, C3, L3)
    assert bool(jnp.allclose(y3, y3_ref, atol=1e-3, rtol=1e-3)), \
        float(jnp.max(jnp.abs(y3 - y3_ref)))

    print("KERNEL_OK")
</pallas_src>

<mosaic_0001>
module attributes {stable_mosaic.version = 11 : i64} {
  func.func @_temporal_block_kernel(%arg0: i32, %arg1: i32, %arg2: memref<1x16x4xbf16, #tpu.memory_space<vmem>>, %arg3: memref<3x4x8xbf16, #tpu.memory_space<vmem>>, %arg4: memref<1x8xf32, #tpu.memory_space<vmem>>, %arg5: memref<3x8x8xbf16, #tpu.memory_space<vmem>>, %arg6: memref<1x8xf32, #tpu.memory_space<vmem>>, %arg7: memref<4x8xbf16, #tpu.memory_space<vmem>>, %arg8: memref<1x8xf32, #tpu.memory_space<vmem>>, %arg9: memref<1x16x8xf32, #tpu.memory_space<vmem>>, %arg10: memref<32x4xbf16, #tpu.memory_space<vmem>>, %arg11: memref<32x8xbf16, #tpu.memory_space<vmem>>) attributes {dimension_semantics = [#tpu.dimension_semantics<parallel>, #tpu.dimension_semantics<arbitrary>], iteration_bounds = array<i64: 2, 1>, scalar_prefetch = 0 : i64, scratch_operands = 2 : i64, tpu.core_type = #tpu.core_type<tc>, window_params = [{transform_indices = @transform_0, window_bounds = array<i64: 1, 16, 4>}, {pipeline_mode = #tpu.pipeline_mode<synchronous>, transform_indices = @transform_1, window_bounds = array<i64: 3, 4, 8>}, {pipeline_mode = #tpu.pipeline_mode<synchronous>, transform_indices = @transform_2, window_bounds = array<i64: 1, 8>}, {pipeline_mode = #tpu.pipeline_mode<synchronous>, transform_indices = @transform_3, window_bounds = array<i64: 3, 8, 8>}, {pipeline_mode = #tpu.pipeline_mode<synchronous>, transform_indices = @transform_4, window_bounds = array<i64: 1, 8>}, {pipeline_mode = #tpu.pipeline_mode<synchronous>, transform_indices = @transform_5, window_bounds = array<i64: 4, 8>}, {pipeline_mode = #tpu.pipeline_mode<synchronous>, transform_indices = @transform_6, window_bounds = array<i64: 1, 8>}, {transform_indices = @transform_7, window_bounds = array<i64: 1, 16, 8>}]} {
    %c0_i32 = arith.constant 0 : i32
    %0 = arith.cmpi eq, %arg1, %c0_i32 : i32
    %1 = arith.extui %0 : i1 to i32
    %c0_i32_0 = arith.constant 0 : i32
    %2 = arith.cmpi ne, %1, %c0_i32_0 : i32
    scf.if %2 {
      %cst_54 = arith.constant 0.000000e+00 : bf16
      %60 = vector.broadcast %cst_54 : bf16 to vector<16x4xbf16>
      %c0_55 = arith.constant 0 : index
      %c0_56 = arith.constant 0 : index
      %61 = vector.load %arg10[%c0_55, %c0_56] : memref<32x4xbf16, #tpu.memory_space<vmem>>, vector<16x4xbf16>
      tpu.vector_store %arg10[%c0_55, %c0_56], %60 {strides = array<i32>} : memref<32x4xbf16, #tpu.memory_space<vmem>>, vector<16x4xbf16>,
      %cst_57 = arith.constant 0.000000e+00 : bf16
      %62 = vector.broadcast %cst_57 : bf16 to vector<16x8xbf16>
      %c0_58 = arith.constant 0 : index
      %c0_59 = arith.constant 0 : index
      %63 = vector.load %arg11[%c0_58, %c0_59] : memref<32x8xbf16, #tpu.memory_space<vmem>>, vector<16x8xbf16>
      tpu.vector_store %arg11[%c0_58, %c0_59], %62 {strides = array<i32>} : memref<32x8xbf16, #tpu.memory_space<vmem>>, vector<16x8xbf16>,
    } else {
    }
    %c0_i32_1 = arith.constant 0 : i32
    %3 = arith.cmpi sgt, %arg1, %c0_i32_1 : i32
    %4 = arith.extui %3 : i1 to i32
    %c0_i32_2 = arith.constant 0 : i32
    %5 = arith.cmpi ne, %4, %c0_i32_2 : i32
    scf.if %5 {
      %c16_54 = arith.constant 16 : index
      %c0_55 = arith.constant 0 : index
      %60 = vector.load %arg10[%c16_54, %c0_55] : memref<32x4xbf16, #tpu.memory_space<vmem>>, vector<16x4xbf16>
      %c0_56 = arith.constant 0 : index
      %c0_57 = arith.constant 0 : index
      %61 = vector.load %arg10[%c0_56, %c0_57] : memref<32x4xbf16, #tpu.memory_space<vmem>>, vector<16x4xbf16>
      tpu.vector_store %arg10[%c0_56, %c0_57], %60 {strides = array<i32>} : memref<32x4xbf16, #tpu.memory_space<vmem>>, vector<16x4xbf16>,
      %c16_58 = arith.constant 16 : index
      %c0_59 = arith.constant 0 : index
      %62 = vector.load %arg11[%c16_58, %c0_59] : memref<32x8xbf16, #tpu.memory_space<vmem>>, vector<16x8xbf16>
      %c0_60 = arith.constant 0 : index
      %c0_61 = arith.constant 0 : index
      %63 = vector.load %arg11[%c0_60, %c0_61] : memref<32x8xbf16, #tpu.memory_space<vmem>>, vector<16x8xbf16>
      tpu.vector_store %arg11[%c0_60, %c0_61], %62 {strides = array<i32>} : memref<32x8xbf16, #tpu.memory_space<vmem>>, vector<16x8xbf16>,
    } else {
    }
    %c0 = arith.constant 0 : index
    %c0_3 = arith.constant 0 : index
    %c0_4 = arith.constant 0 : index
    %6 = vector.load %arg2[%c0, %c0_3, %c0_4] : memref<1x16x4xbf16, #tpu.memory_space<vmem>>, vector<1x16x4xbf16>
    %7 = vector.shape_cast %6 : vector<1x16x4xbf16> to vector<16x4xbf16>
    %c16 = arith.constant 16 : index
    %c0_5 = arith.constant 0 : index
    %8 = vector.load %arg10[%c16, %c0_5] : memref<32x4xbf16, #tpu.memory_space<vmem>>, vector<16x4xbf16>
    tpu.vector_store %arg10[%c16, %c0_5], %7 {strides = array<i32>} : memref<32x4xbf16, #tpu.memory_space<vmem>>, vector<16x4xbf16>,
    %c12 = arith.constant 12 : index
    %c0_6 = arith.constant 0 : index
    %9 = vector.load %arg10[%c12, %c0_6] : memref<32x4xbf16, #tpu.memory_space<vmem>>, vector<16x4xbf16>
    %c0_7 = arith.constant 0 : index
    %c0_8 = arith.constant 0 : index
    %c0_9 = arith.constant 0 : index
    %10 = vector.load %arg3[%c0_7, %c0_8, %c0_9] : memref<3x4x8xbf16, #tpu.memory_space<vmem>>, vector<1x4x8xbf16>
    %11 = vector.shape_cast %10 : vector<1x4x8xbf16> to vector<4x8xbf16>
    %cst = arith.constant dense<0.000000e+00> : vector<16x8xf32>
    %12 = tpu.matmul %9, %11, %cst {dimension_numbers = #tpu.dot_dimension_numbers<[1], [0], [0], [1], [0, 0, 1, 1], [], []>} : vector<16x4xbf16>, vector<4x8xbf16>, vector<16x8xf32> -> vector<16x8xf32>
    %c14 = arith.constant 14 : index
    %c0_10 = arith.constant 0 : index
    %13 = vector.load %arg10[%c14, %c0_10] : memref<32x4xbf16, #tpu.memory_space<vmem>>, vector<16x4xbf16>
    %c1 = arith.constant 1 : index
    %c0_11 = arith.constant 0 : index
    %c0_12 = arith.constant 0 : index
    %14 = vector.load %arg3[%c1, %c0_11, %c0_12] : memref<3x4x8xbf16, #tpu.memory_space<vmem>>, vector<1x4x8xbf16>
    %15 = vector.shape_cast %14 : vector<1x4x8xbf16> to vector<4x8xbf16>
    %cst_13 = arith.constant dense<0.000000e+00> : vector<16x8xf32>
    %16 = tpu.matmul %13, %15, %cst_13 {dimension_numbers = #tpu.dot_dimension_numbers<[1], [0], [0], [1], [0, 0, 1, 1], [], []>} : vector<16x4xbf16>, vector<4x8xbf16>, vector<16x8xf32> -> vector<16x8xf32>
    %17 = arith.addf %12, %16 : vector<16x8xf32>
    %c16_14 = arith.constant 16 : index
    %c0_15 = arith.constant 0 : index
    %18 = vector.load %arg10[%c16_14, %c0_15] : memref<32x4xbf16, #tpu.memory_space<vmem>>, vector<16x4xbf16>
    %c2 = arith.constant 2 : index
    %c0_16 = arith.constant 0 : index
    %c0_17 = arith.constant 0 : index
    %19 = vector.load %arg3[%c2, %c0_16, %c0_17] : memref<3x4x8xbf16, #tpu.memory_space<vmem>>, vector<1x4x8xbf16>
    %20 = vector.shape_cast %19 : vector<1x4x8xbf16> to vector<4x8xbf16>
    %cst_18 = arith.constant dense<0.000000e+00> : vector<16x8xf32>
    %21 = tpu.matmul %18, %20, %cst_18 {dimension_numbers = #tpu.dot_dimension_numbers<[1], [0], [0], [1], [0, 0, 1, 1], [], []>} : vector<16x4xbf16>, vector<4x8xbf16>, vector<16x8xf32> -> vector<16x8xf32>
    %22 = arith.addf %17, %21 : vector<16x8xf32>
    %c0_19 = arith.constant 0 : index
    %c0_20 = arith.constant 0 : index
    %23 = vector.load %arg4[%c0_19, %c0_20] : memref<1x8xf32, #tpu.memory_space<vmem>>, vector<1x8xf32>
    %24 = vector.broadcast %23 : vector<1x8xf32> to vector<16x8xf32>
    %25 = arith.addf %22, %24 : vector<16x8xf32>
    %cst_21 = arith.constant 0.000000e+00 : f32
    %26 = vector.broadcast %cst_21 : f32 to vector<16x8xf32>
    %27 = arith.maximumf %25, %26 : vector<16x8xf32>
    %28 = arith.truncf %27 : vector<16x8xf32> to vector<16x8xbf16>
    %c16_22 = arith.constant 16 : index
    %c0_23 = arith.constant 0 : index
    %29 = vector.load %arg11[%c16_22, %c0_23] : memref<32x8xbf16, #tpu.memory_space<vmem>>, vector<16x8xbf16>
    tpu.vector_store %arg11[%c16_22, %c0_23], %28 {strides = array<i32>} : memref<32x8xbf16, #tpu.memory_space<vmem>>, vector<16x8xbf16>,
    %c12_24 = arith.constant 12 : index
    %c0_25 = arith.constant 0 : index
    %30 = vector.load %arg11[%c12_24, %c0_25] : memref<32x8xbf16, #tpu.memory_space<vmem>>, vector<16x8xbf16>
    %c0_26 = arith.constant 0 : index
    %c0_27 = arith.constant 0 : index
    %c0_28 = arith.constant 0 : index
    %31 = vector.load %arg5[%c0_26, %c0_27, %c0_28] : memref<3x8x8xbf16, #tpu.memory_space<vmem>>, vector<1x8x8xbf16>
    %32 = vector.shape_cast %31 : vector<1x8x8xbf16> to vector<8x8xbf16>
    %cst_29 = arith.constant dense<0.000000e+00> : vector<16x8xf32>
    %33 = tpu.matmul %30, %32, %cst_29 {dimension_numbers = #tpu.dot_dimension_numbers<[1], [0], [0], [1], [0, 0, 1, 1], [], []>} : vector<16x8xbf16>, vector<8x8xbf16>, vector<16x8xf32> -> vector<16x8xf32>
    %c14_30 = arith.constant 14 : index
    %c0_31 = arith.constant 0 : index
    %34 = vector.load %arg11[%c14_30, %c0_31] : memref<32x8xbf16, #tpu.memory_space<vmem>>, vector<16x8xbf16>
    %c1_32 = arith.constant 1 : index
    %c0_33 = arith.constant 0 : index
    %c0_34 = arith.constant 0 : index
    %35 = vector.load %arg5[%c1_32, %c0_33, %c0_34] : memref<3x8x8xbf16, #tpu.memory_space<vmem>>, vector<1x8x8xbf16>
    %36 = vector.shape_cast %35 : vector<1x8x8xbf16> to vector<8x8xbf16>
    %cst_35 = arith.constant dense<0.000000e+00> : vector<16x8xf32>
    %37 = tpu.matmul %34, %36, %cst_35 {dimension_numbers = #tpu.dot_dimension_numbers<[1], [0], [0], [1], [0, 0, 1, 1], [], []>} : vector<16x8xbf16>, vector<8x8xbf16>, vector<16x8xf32> -> vector<16x8xf32>
    %38 = arith.addf %33, %37 : vector<16x8xf32>
    %c16_36 = arith.constant 16 : index
    %c0_37 = arith.constant 0 : index
    %39 = vector.load %arg11[%c16_36, %c0_37] : memref<32x8xbf16, #tpu.memory_space<vmem>>, vector<16x8xbf16>
    %c2_38 = arith.constant 2 : index
    %c0_39 = arith.constant 0 : index
    %c0_40 = arith.constant 0 : index
    %40 = vector.load %arg5[%c2_38, %c0_39, %c0_40] : memref<3x8x8xbf16, #tpu.memory_space<vmem>>, vector<1x8x8xbf16>
    %41 = vector.shape_cast %40 : vector<1x8x8xbf16> to vector<8x8xbf16>
    %cst_41 = arith.constant dense<0.000000e+00> : vector<16x8xf32>
    %42 = tpu.matmul %39, %41, %cst_41 {dimension_numbers = #tpu.dot_dimension_numbers<[1], [0], [0], [1], [0, 0, 1, 1], [], []>} : vector<16x8xbf16>, vector<8x8xbf16>, vector<16x8xf32> -> vector<16x8xf32>
    %43 = arith.addf %38, %42 : vector<16x8xf32>
    %c0_42 = arith.constant 0 : index
    %c0_43 = arith.constant 0 : index
    %44 = vector.load %arg6[%c0_42, %c0_43] : memref<1x8xf32, #tpu.memory_space<vmem>>, vector<1x8xf32>
    %45 = vector.broadcast %44 : vector<1x8xf32> to vector<16x8xf32>
    %46 = arith.addf %43, %45 : vector<16x8xf32>
    %cst_44 = arith.constant 0.000000e+00 : f32
    %47 = vector.broadcast %cst_44 : f32 to vector<16x8xf32>
    %48 = arith.maximumf %46, %47 : vector<16x8xf32>
    %c0_45 = arith.constant 0 : index
    %c0_46 = arith.constant 0 : index
    %49 = vector.load %arg7[%c0_45, %c0_46] : memref<4x8xbf16, #tpu.memory_space<vmem>>, vector<4x8xbf16>
    %cst_47 = arith.constant dense<0.000000e+00> : vector<16x8xf32>
    %50 = tpu.matmul %7, %49, %cst_47 {dimension_numbers = #tpu.dot_dimension_numbers<[1], [0], [0], [1], [0, 0, 1, 1], [], []>} : vector<16x4xbf16>, vector<4x8xbf16>, vector<16x8xf32> -> vector<16x8xf32>
    %c0_48 = arith.constant 0 : index
    %c0_49 = arith.constant 0 : index
    %51 = vector.load %arg8[%c0_48, %c0_49] : memref<1x8xf32, #tpu.memory_space<vmem>>, vector<1x8xf32>
    %52 = vector.broadcast %51 : vector<1x8xf32> to vector<16x8xf32>
    %53 = arith.addf %50, %52 : vector<16x8xf32>
    %54 = arith.addf %48, %53 : vector<16x8xf32>
    %cst_50 = arith.constant 0.000000e+00 : f32
    %55 = vector.broadcast %cst_50 : f32 to vector<16x8xf32>
    %56 = arith.maximumf %54, %55 : vector<16x8xf32>
    %c0_51 = arith.constant 0 : index
    %c0_52 = arith.constant 0 : index
    %c0_53 = arith.constant 0 : index
    %57 = vector.load %arg9[%c0_51, %c0_52, %c0_53] : memref<1x16x8xf32, #tpu.memory_space<vmem>>, vector<1x16x8xf32>
    %58 = vector.shape_cast %57 : vector<1x16x8xf32> to vector<16x8xf32>
    %59 = vector.shape_cast %56 : vector<16x8xf32> to vector<1x16x8xf32>
    tpu.vector_store %arg9[%c0_51, %c0_52, %c0_53], %59 {strides = array<i32>} : memref<1x16x8xf32, #tpu.memory_space<vmem>>, vector<1x16x8xf32>,
    return
  }
  func.func @transform_0(%arg0: i32, %arg1: i32) -> (i32, i32, i32) {
    %c0_i32 = arith.constant 0 : i32
    %c0_i32_0 = arith.constant 0 : i32
    return %arg0, %arg1, %c0_i32 : i32, i32, i32
  }
  func.func @transform_1(%arg0: i32, %arg1: i32) -> (i32, i32, i32) {
    %c0_i32 = arith.constant 0 : i32
    %c0_i32_0 = arith.constant 0 : i32
    %c0_i32_1 = arith.constant 0 : i32
    %c0_i32_2 = arith.constant 0 : i32
    return %c0_i32, %c0_i32_0, %c0_i32_1 : i32, i32, i32
  }
  func.func @transform_2(%arg0: i32, %arg1: i32) -> (i32, i32) {
    %c0_i32 = arith.constant 0 : i32
    %c0_i32_0 = arith.constant 0 : i32
    %c0_i32_1 = arith.constant 0 : i32
    return %c0_i32, %c0_i32_0 : i32, i32
  }
  func.func @transform_3(%arg0: i32, %arg1: i32) -> (i32, i32, i32) {
    %c0_i32 = arith.constant 0 : i32
    %c0_i32_0 = arith.constant 0 : i32
    %c0_i32_1 = arith.constant 0 : i32
    %c0_i32_2 = arith.constant 0 : i32
    return %c0_i32, %c0_i32_0, %c0_i32_1 : i32, i32, i32
  }
  func.func @transform_4(%arg0: i32, %arg1: i32) -> (i32, i32) {
    %c0_i32 = arith.constant 0 : i32
    %c0_i32_0 = arith.constant 0 : i32
    %c0_i32_1 = arith.constant 0 : i32
    return %c0_i32, %c0_i32_0 : i32, i32
  }
  func.func @transform_5(%arg0: i32, %arg1: i32) -> (i32, i32) {
    %c0_i32 = arith.constant 0 : i32
    %c0_i32_0 = arith.constant 0 : i32
    %c0_i32_1 = arith.constant 0 : i32
    return %c0_i32, %c0_i32_0 : i32, i32
  }
  func.func @transform_6(%arg0: i32, %arg1: i32) -> (i32, i32) {
    %c0_i32 = arith.constant 0 : i32
    %c0_i32_0 = arith.constant 0 : i32
    %c0_i32_1 = arith.constant 0 : i32
    return %c0_i32, %c0_i32_0 : i32, i32
  }
  func.func @transform_7(%arg0: i32, %arg1: i32) -> (i32, i32, i32) {
    %c0_i32 = arith.constant 0 : i32
    %c0_i32_0 = arith.constant 0 : i32
    return %arg0, %arg1, %c0_i32 : i32, i32, i32
  }
}

</mosaic_0001>

<llo_original>
// kernel: tpu_custom_call.1
$region0: #{tpu_custom_call.1}
  #allocation0 [shape = 'u32[]', space=smem, size = 0x4, offset = 0x4, fixed_abs, tag = 'smem constant byte address 0x4 - core index']
  #allocation1 [shape = 'u32[144,128]{1,0:T(1,128)}', space=vmem, size = 0x12000, scoped, tag = 'internal scratch']
  #allocation2 [shape = 'bf16[32,4]{1,0:T(8,128)(2,1)}', space=vmem, size = 0x2000, scoped, tag = 'scratch operand']
  #allocation3 [shape = 'bf16[32,8]{1,0:T(8,128)(2,1)}', space=vmem, size = 0x2000, scoped, tag = 'scratch operand']
  %s0 = inlined_call_operand.vmem [shape: bf16[2,16,4], index: 0, kind: input, shape index: {}]
  %s1 = inlined_call_operand.vmem [shape: bf16[3,4,8], index: 1, kind: input, shape index: {}]
  %s2 = inlined_call_operand.vmem [shape: f32[1,8], index: 2, kind: input, shape index: {}]
  %s3 = inlined_call_operand.vmem [shape: bf16[3,8,8], index: 3, kind: input, shape index: {}]
  %s4 = inlined_call_operand.vmem [shape: f32[1,8], index: 4, kind: input, shape index: {}]
  %s5 = inlined_call_operand.vmem [shape: bf16[4,8], index: 5, kind: input, shape index: {}]
  %s6 = inlined_call_operand.vmem [shape: f32[1,8], index: 6, kind: input, shape index: {}]
  %s7 = inlined_call_operand.vmem [shape: f32[2,16,8], index: 7, kind: output, shape index: {}]
  %s8 = sld [smem:[#allocation0]]
  $region69: #{tpu_custom_call.1} parent=0
    _
  %s10 = ssub.s32 1, %s8
  %s11 = scalar_select 0, %s10, %s8
  loop: start=0, step=1, limit=4
  $region2: #{tpu_custom_call.1} parent=0 // loop_pre_header
    _
  $region3: #{tpu_custom_call.1} parent=0 // loop_header
    %s13 = sphi 0, %s17
    %p14 = scmp.ge.s32.totalorder %s13, 4
    %s20 = sphi 0, %s32
    %s21 = sphi 0, %s28
    %s22 = sphi 0, %s20
    %s23 = sphi 0, %s21
    %s24 = sphi 0, %s22
    %s25 = sphi 0, %s23
    %s37 = sphi 0, %s39
    %s40 = sphi 0, %s37
    %s41 = sphi 0, %s40
    %s57 = sphi 0, %s41
    %s61 = sphi 0, %s61
    %s63 = sphi 0, %s61
    %s64 = sphi 0, %s63
    %s78 = sphi 0, %s64
    %s82 = sphi 0, %s82
    %s84 = sphi 0, %s82
    %s85 = sphi 0, %s84
    %s99 = sphi 0, %s85
    %s103 = sphi 0, %s103
    %s105 = sphi 0, %s103
    %s106 = sphi 0, %s105
    %s120 = sphi 0, %s106
    %s124 = sphi 0, %s124
    %s126 = sphi 0, %s124
    %s127 = sphi 0, %s126
    %s141 = sphi 0, %s127
    %s145 = sphi 0, %s145
    %s147 = sphi 0, %s145
    %s148 = sphi 0, %s147
    %s162 = sphi 0, %s148
    %s166 = sphi 0, %s166
    %s168 = sphi 0, %s166
    %s169 = sphi 0, %s168
    %s183 = sphi 0, %s169
    %s191 = sphi 0, %s193
    %s194 = sphi 0, %s191
    %s195 = sphi 0, %s194
    %s211 = sphi 0, %s195
  $region4: #{tpu_custom_call.1} parent=0 // loop_header_branch
    %16 = sbr.rel (%p14) target = $region8
  $region5: #{tpu_custom_call.1} parent=0 // loop_body
    %s18 = ssub.s32 %s13, 1
    %s19 = ssub.s32 %s13, 2
    %s26 = sadd.s32 1, %s21
    %p27 = scmp.ge.s32.totalorder %s26, 1
    %s28 = scalar_select %p27, 0, %s26
    %s29 = sadd.s32 1, %s20
    %s30 = scalar_select %p27, %s29, %s20
    %p31 = scmp.ge.s32.totalorder %s30, 2
    %s32 = scalar_select %p31, 0, %s30
    %s33 = ssub.s32 %s20, %s32
    %s34 = ssub.s32 %s21, %s28
    %s35 = sor.u32 %s33, %s34
    %p36 = scmp.eq.s32.totalorder %s35, 0
    %s38 = sadd.s32 %s37, 1
    %s39 = scalar_select %p36, %s37, %s38
    %p42 = pneg %p36
    %p43 = scmp.eq.s32.totalorder %s13, 1
    %p44 = por %p42, %p43
    %p45 = scmp.ne.s32.totalorder %s37, %s40
    %p46 = scmp.eq.s32.totalorder %s13, 0
    %p47 = por %p45, %p46
    %p48 = scmp.ne.s32.totalorder %s37, %s40
    %p49 = scmp.eq.s32.totalorder %s18, 1
    %p50 = por %p48, %p49
    %p51 = scmp.ne.s32.totalorder %s40, %s41
    %p52 = scmp.eq.s32.totalorder %s18, 0
    %p53 = por %p51, %p52
    %p54 = scmp.ne.s32.totalorder %s40, %s41
    %p55 = scmp.eq.s32.totalorder %s19, 1
    %p56 = por %p54, %p55
    %p58 = scmp.ne.s32.totalorder %s41, %s57
    %p59 = scmp.eq.s32.totalorder %s19, 0
    %p60 = por %p58, %p59
    %s62 = sadd.s32 %s61, 1
    %p65 = scmp.eq.s32.totalorder %s13, 1
    %p66 = scmp.ne.s32.totalorder %s61, %s63
    %p67 = scmp.eq.s32.totalorder %s13, 0
    %p68 = por %p66, %p67
    %p69 = scmp.ne.s32.totalorder %s61, %s63
    %p70 = scmp.eq.s32.totalorder %s18, 1
    %p71 = por %p69, %p70
    %p72 = scmp.ne.s32.totalorder %s63, %s64
    %p73 = scmp.eq.s32.totalorder %s18, 0
    %p74 = por %p72, %p73
    %p75 = scmp.ne.s32.totalorder %s63, %s64
    %p76 = scmp.eq.s32.totalorder %s19, 1
    %p77 = por %p75, %p76
    %p79 = scmp.ne.s32.totalorder %s64, %s78
    %p80 = scmp.eq.s32.totalorder %s19, 0
    %p81 = por %p79, %p80
    %s83 = sadd.s32 %s82, 1
    %p86 = scmp.eq.s32.totalorder %s13, 1
    %p87 = scmp.ne.s32.totalorder %s82, %s84
    %p88 = scmp.eq.s32.totalorder %s13, 0
    %p89 = por %p87, %p88
    %p90 = scmp.ne.s32.totalorder %s82, %s84
    %p91 = scmp.eq.s32.totalorder %s18, 1
    %p92 = por %p90, %p91
    %p93 = scmp.ne.s32.totalorder %s84, %s85
    %p94 = scmp.eq.s32.totalorder %s18, 0
    %p95 = por %p93, %p94
    %p96 = scmp.ne.s32.totalorder %s84, %s85
    %p97 = scmp.eq.s32.totalorder %s19, 1
    %p98 = por %p96, %p97
    %p100 = scmp.ne.s32.totalorder %s85, %s99
    %p101 = scmp.eq.s32.totalorder %s19, 0
    %p102 = por %p100, %p101
    %s104 = sadd.s32 %s103, 1
    %p107 = scmp.eq.s32.totalorder %s13, 1
    %p108 = scmp.ne.s32.totalorder %s103, %s105
    %p109 = scmp.eq.s32.totalorder %s13, 0
    %p110 = por %p108, %p109
    %p111 = scmp.ne.s32.totalorder %s103, %s105
    %p112 = scmp.eq.s32.totalorder %s18, 1
    %p113 = por %p111, %p112
    %p114 = scmp.ne.s32.totalorder %s105, %s106
    %p115 = scmp.eq.s32.totalorder %s18, 0
    %p116 = por %p114, %p115
    %p117 = scmp.ne.s32.totalorder %s105, %s106
    %p118 = scmp.eq.s32.totalorder %s19, 1
    %p119 = por %p117, %p118
    %p121 = scmp.ne.s32.totalorder %s106, %s120
    %p122 = scmp.eq.s32.totalorder %s19, 0
    %p123 = por %p121, %p122
    %s125 = sadd.s32 %s124, 1
    %p128 = scmp.eq.s32.totalorder %s13, 1
    %p129 = scmp.ne.s32.totalorder %s124, %s126
    %p130 = scmp.eq.s32.totalorder %s13, 0
    %p131 = por %p129, %p130
    %p132 = scmp.ne.s32.totalorder %s124, %s126
    %p133 = scmp.eq.s32.totalorder %s18, 1
    %p134 = por %p132, %p133
    %p135 = scmp.ne.s32.totalorder %s126, %s127
    %p136 = scmp.eq.s32.totalorder %s18, 0
    %p137 = por %p135, %p136
    %p138 = scmp.ne.s32.totalorder %s126, %s127
    %p139 = scmp.eq.s32.totalorder %s19, 1
    %p140 = por %p138, %p139
    %p142 = scmp.ne.s32.totalorder %s127, %s141
    %p143 = scmp.eq.s32.totalorder %s19, 0
    %p144 = por %p142, %p143
    %s146 = sadd.s32 %s145, 1
    %p149 = scmp.eq.s32.totalorder %s13, 1
    %p150 = scmp.ne.s32.totalorder %s145, %s147
    %p151 = scmp.eq.s32.totalorder %s13, 0
    %p152 = por %p150, %p151
    %p153 = scmp.ne.s32.totalorder %s145, %s147
    %p154 = scmp.eq.s32.totalorder %s18, 1
    %p155 = por %p153, %p154
    %p156 = scmp.ne.s32.totalorder %s147, %s148
    %p157 = scmp.eq.s32.totalorder %s18, 0
    %p158 = por %p156, %p157
    %p159 = scmp.ne.s32.totalorder %s147, %s148
    %p160 = scmp.eq.s32.totalorder %s19, 1
    %p161 = por %p159, %p160
    %p163 = scmp.ne.s32.totalorder %s148, %s162
    %p164 = scmp.eq.s32.totalorder %s19, 0
    %p165 = por %p163, %p164
    %s167 = sadd.s32 %s166, 1
    %p170 = scmp.eq.s32.totalorder %s13, 1
    %p171 = scmp.ne.s32.totalorder %s166, %s168
    %p172 = scmp.eq.s32.totalorder %s13, 0
    %p173 = por %p171, %p172
    %p174 = scmp.ne.s32.totalorder %s166, %s168
    %p175 = scmp.eq.s32.totalorder %s18, 1
    %p176 = por %p174, %p175
    %p177 = scmp.ne.s32.totalorder %s168, %s169
    %p178 = scmp.eq.s32.totalorder %s18, 0
    %p179 = por %p177, %p178
    %p180 = scmp.ne.s32.totalorder %s168, %s169
    %p181 = scmp.eq.s32.totalorder %s19, 1
    %p182 = por %p180, %p181
    %p184 = scmp.ne.s32.totalorder %s169, %s183
    %p185 = scmp.eq.s32.totalorder %s19, 0
    %p186 = por %p184, %p185
    %s187 = ssub.s32 %s20, %s32
    %s188 = ssub.s32 %s21, %s28
    %s189 = sor.u32 %s187, %s188
    %p190 = scmp.eq.s32.totalorder %s189, 0
    %s192 = sadd.s32 %s191, 1
    %s193 = scalar_select %p190, %s191, %s192
    %p196 = pneg %p190
    %p197 = scmp.eq.s32.totalorder %s13, 1
    %p198 = por %p196, %p197
    %p199 = scmp.ne.s32.totalorder %s191, %s194
    %p200 = scmp.eq.s32.totalorder %s13, 0
    %p201 = por %p199, %p200
    %p202 = scmp.ne.s32.totalorder %s191, %s194
    %p203 = scmp.eq.s32.totalorder %s18, 1
    %p204 = por %p202, %p203
    %p205 = scmp.ne.s32.totalorder %s194, %s195
    %p206 = scmp.eq.s32.totalorder %s18, 0
    %p207 = por %p205, %p206
    %p208 = scmp.ne.s32.totalorder %s194, %s195
    %p209 = scmp.eq.s32.totalorder %s19, 1
    %p210 = por %p208, %p209
    %p212 = scmp.ne.s32.totalorder %s195, %s211
    %p213 = scmp.eq.s32.totalorder %s19, 0
    %p214 = por %p212, %p213
    %p215 = scmp.le.s32.totalorder 1, %s13
    %p216 = scmp.lt.s32.totalorder %s13, 3
    %p217 = pnand %p215, %p216
    %p218 = pneg %p217
    // Predicated region
    $region9: #{tpu_custom_call.1} parent=5 // pred_check
      _
    $region10: #{tpu_custom_call.1} parent=5 // pred_check_branch
      %220 = sbr.rel (%p217) target = $region12
    $region11: #{tpu_custom_call.1} parent=5 // pred_region
      %s221 = ssub.s32 %s13, 1
      // Predicated region
      $region13: #{tpu_custom_call.1} parent=11 // pred_check
        %p222 = pneg %p74
      $region14: #{tpu_custom_call.1} parent=11 // pred_check_branch
        %224 = sbr.rel (%p222) target = $region16
      $region15: #{tpu_custom_call.1} parent=11 // pred_region
        _
      $region16: #{tpu_custom_call.1} parent=11 // pred_fallthru
        _
      // Predicated region
      $region17: #{tpu_custom_call.1} parent=11 // pred_check
        %p225 = pneg %p95
      $region18: #{tpu_custom_call.1} parent=11 // pred_check_branch
        %227 = sbr.rel (%p225) target = $region20
      $region19: #{tpu_custom_call.1} parent=11 // pred_region
        _
      $region20: #{tpu_custom_call.1} parent=11 // pred_fallthru
        _
      // Predicated region
      $region21: #{tpu_custom_call.1} parent=11 // pred_check
        %p228 = pneg %p116
      $region22: #{tpu_custom_call.1} parent=11 // pred_check_branch
        %230 = sbr.rel (%p228) target = $region24
      $region23: #{tpu_custom_call.1} parent=11 // pred_region
        _
      $region24: #{tpu_custom_call.1} parent=11 // pred_fallthru
        _
      // Predicated region
      $region25: #{tpu_custom_call.1} parent=11 // pred_check
        %p231 = pneg %p137
      $region26: #{tpu_custom_call.1} parent=11 // pred_check_branch
        %233 = sbr.rel (%p231) target = $region28
      $region27: #{tpu_custom_call.1} parent=11 // pred_region
        _
      $region28: #{tpu_custom_call.1} parent=11 // pred_fallthru
        _
      // Predicated region
      $region29: #{tpu_custom_call.1} parent=11 // pred_check
        %p234 = pneg %p158
      $region30: #{tpu_custom_call.1} parent=11 // pred_check_branch
        %236 = sbr.rel (%p234) target = $region32
      $region31: #{tpu_custom_call.1} parent=11 // pred_region
        _
      $region32: #{tpu_custom_call.1} parent=11 // pred_fallthru
        _
      // Predicated region
      $region33: #{tpu_custom_call.1} parent=11 // pred_check
        %p237 = pneg %p179
      $region34: #{tpu_custom_call.1} parent=11 // pred_check_branch
        %239 = sbr.rel (%p237) target = $region36
      $region35: #{tpu_custom_call.1} parent=11 // pred_region
        _
      $region36: #{tpu_custom_call.1} parent=11 // pred_fallthru
        _
    $region12: #{tpu_custom_call.1} parent=5 // pred_fallthru
      _
    %p240 = scmp.lt.s32.totalorder %s13, 2
    // Predicated region
    $region37: #{tpu_custom_call.1} parent=5 // pred_check
      %p241 = pneg %p240
    $region38: #{tpu_custom_call.1} parent=5 // pred_check_branch
      %243 = sbr.rel (%p241) target = $region40
    $region39: #{tpu_custom_call.1} parent=5 // pred_region
      // Predicated region
      $region41: #{tpu_custom_call.1} parent=39 // pred_check
        %p244 = pneg %p47
      $region42: #{tpu_custom_call.1} parent=39 // pred_check_branch
        %246 = sbr.rel (%p244) target = $region44
      $region43: #{tpu_custom_call.1} parent=39 // pred_region
        %s247 = smul.u32 2, %s21
        %p248 = scmp.lt.s32.totalorder %s20, 1
        %s249 = scalar_select %p248, %s20, 1
        %p250 = scmp.lt.s32.totalorder %s247, 1
        %s251 = scalar_select %p250, %s247, 1
        %s252 = smul.addr %s249, 2
        %s253 = sadd.s32 %s251, %s252
        %s254 = smul.addr %s253, 4
        %s255 = scalar_lea.vmem %s0, %s254
        %s256 = smul.u32 2, %s21
      $region44: #{tpu_custom_call.1} parent=39 // pred_fallthru
        _
    $region40: #{tpu_custom_call.1} parent=5 // pred_fallthru
      _
    %p257 = scmp.le.s32.totalorder 1, %s13
    %p258 = scmp.lt.s32.totalorder %s13, 3
    %p259 = pnand %p257, %p258
    %p260 = pneg %p259
    // Predicated region
    $region45: #{tpu_custom_call.1} parent=5 // pred_check
      _
    $region46: #{tpu_custom_call.1} parent=5 // pred_check_branch
      %262 = sbr.rel (%p259) target = $region48
    $region47: #{tpu_custom_call.1} parent=5 // pred_region
      %s263 = ssub.s32 %s13, 1
      %s264 = smul.u32 2, %s23
      %p265 = scmp.lt.s32.totalorder %s22, 1
      %s266 = scalar_select %p265, %s22, 1
      %p267 = scmp.lt.s32.totalorder %s264, 1
      %s268 = scalar_select %p267, %s264, 1
      %s269 = smul.addr %s266, 2
      %s270 = sadd.s32 %s268, %s269
      %s271 = smul.addr %s270, 4
      %s272 = scalar_lea.vmem %s0, %s271
      %p273 = pneg %p53
      %p274 = pneg %p50
      %p275 = pneg %p74
      %p276 = pneg %p71
      %p277 = pneg %p95
      %p278 = pneg %p92
      %p279 = pneg %p116
      %p280 = pneg %p113
      %p281 = pneg %p137
      %p282 = pneg %p134
      %p283 = pneg %p158
      %p284 = pneg %p155
      %p285 = pneg %p179
      %p286 = pneg %p176
      %p287 = pneg %p207
      %p288 = pneg %p204
      %s289 = smul.u32 2, %s23
      %p290 = scmp.lt.s32.totalorder %s22, 1
      %s291 = scalar_select %p290, %s22, 1
      %p292 = scmp.lt.s32.totalorder %s289, 1
      %s293 = scalar_select %p292, %s289, 1
      %s294 = smul.addr %s291, 2
      %s295 = sadd.s32 %s293, %s294
      %s296 = smul.addr %s295, 8
      %s297 = scalar_lea.vmem %s7, %s296
      %s298 = smul.u32 2, %s23
      %p299 = scmp.lt.s32.totalorder %s22, 1
      %s300 = scalar_select %p299, %s22, 1
      %p301 = scmp.lt.s32.totalorder %s298, 1
      %s302 = scalar_select %p301, %s298, 1
      %s303 = smul.addr %s300, 2
      %s304 = sadd.s32 %s302, %s303
      %s305 = smul.addr %s304, 4
      %s306 = scalar_lea.vmem %s0, %s305
      %s307 = smul.u32 2, %s23
      %s308 = smul.u32 2, %s23
      %p309 = scmp.lt.s32.totalorder %s22, 1
      %s310 = scalar_select %p309, %s22, 1
      %p311 = scmp.lt.s32.totalorder %s308, 1
      %s312 = scalar_select %p311, %s308, 1
      %s313 = smul.addr %s310, 2
      %s314 = sadd.s32 %s312, %s313
      %s315 = smul.addr %s314, 8
      %s316 = scalar_lea.vmem %s7, %s315
      %s317 = smul.u32 2, %s23
      %p319 = scmp.eq.s32.totalorder %s23, 0
      // Predicated region
      $region49: #{tpu_custom_call.1} parent=47 // pred_check
        %p320 = pneg %p319
      $region50: #{tpu_custom_call.1} parent=47 // pred_check_branch
        %322 = sbr.rel (%p320) target = $region52
      $region51: #{tpu_custom_call.1} parent=47 // pred_region
        %vm323 = vcmask 27648
        %324 = vst.msk [vmem:[#allocation2] sm:$0xf] %vm323, 0
        %325 = vst.msk [vmem:[#allocation2 + $0x4] sm:$0xf] %vm323, 0
        %vm326 = vcmask 60416
        %327 = vst.msk [vmem:[#allocation3] sm:$0xf] %vm326, 0
        %328 = vst.msk [vmem:[#allocation3 + $0x4] sm:$0xf] %vm326, 0
      $region52: #{tpu_custom_call.1} parent=47 // pred_fallthru
        _
      %p329 = scmp.gt.s32.totalorder %s23, 0
      // Predicated region
      $region53: #{tpu_custom_call.1} parent=47 // pred_check
        %p330 = pneg %p329
      $region54: #{tpu_custom_call.1} parent=47 // pred_check_branch
        %332 = sbr.rel (%p330) target = $region56
      $region55: #{tpu_custom_call.1} parent=47 // pred_region
        %v333 = vld [vmem:[#allocation2 + $0x8] sm:$0xf]
        %v334 = vld [vmem:[#allocation2 + $0xc] sm:$0xf]
        %vm335 = vcmask 27648
        %336 = vst.msk [vmem:[#allocation2] sm:$0xf] %vm335, %v333
        %337 = vst.msk [vmem:[#allocation2 + $0x4] sm:$0xf] %vm335, %v334
        %v338 = vld [vmem:[#allocation3 + $0x8] sm:$0xf]
        %v339 = vld [vmem:[#allocation3 + $0xc] sm:$0xf]
        %vm340 = vcmask 60416
        %341 = vst.msk [vmem:[#allocation3] sm:$0xf] %vm340, %v338
        %342 = vst.msk [vmem:[#allocation3 + $0x4] sm:$0xf] %vm340, %v339
      $region56: #{tpu_custom_call.1} parent=47 // pred_fallthru
        _
      %v343 = vld [vmem:[%s306] sm:$0xf]
      %v344 = vld [vmem:[%s306 + $0x4] sm:$0xf]
      %vm345 = vcmask 27648
      %346 = vst.msk [vmem:[#allocation2 + $0x8] sm:$0xf] %vm345, %v343
      %347 = vst.msk [vmem:[#allocation2 + $0xc] sm:$0xf] %vm345, %v344
      %v348 = vld [vmem:[#allocation2 + $0x4] sm:$0xc]
      %v349 = vld [vmem:[#allocation2 + $0x8] sm:$0xf]
      %v350 = vld [vmem:[#allocation2 + $0xc] sm:$0x3]
      %v351 = vld [vmem:[%s1] sm:$0x3]
      %v352 = vld [vmem:[#allocation2 + $0x4] sm:$0x8]
      %v353 = vld [vmem:[#allocation2 + $0xc] sm:$0x7]
      %s354 = scalar_lea.vmem %s1, 2
      %v355 = vld [vmem:[%s354] sm:$0x3]
      %v359 = vunpack.c.l.b16 %v352
      %v360 = vunpack.c.l.b16 %v349
      %v361 = vunpack.c.l.b16 %v353
      %v362 = vpack.c.b16 %v360, %v359
      %v363 = vpack.c.b16 %v361, %v361
      %vm364 = vcmask 1044480
      %v365 = vrot.slane %v362, 3
      %v366 = vrot.slane %v363, 3
      %v367 = vsel %vm364, %v365, %v366
      %vm368 = vcmask 31744
      %v370 = vsel %vm368, %v367, 0
      %vm372 = vcmask 1041408
      %v374 = vsel %vm372, %v355, 0
      %376 = vmatprep.subr.bf16.mxu0 0
      %377 = vmatpush1.bf16.msra.mxu0 0
      %378 = vmatprep.subr.bf16.mxu0 0
      %379 = vmatpush1.bf16.msra.mxu0 0
      %380 = vmatprep.subr.bf16.mxu0 0
      %381 = vmatpush1.bf16.msra.mxu0 0
      %382 = vmatprep.subr.bf16.mxu0 0
      %383 = vmatpush1.bf16.msra.mxu0 0
      %384 = vmatprep.subr.bf16.mxu0 0
      %385 = vmatpush1.bf16.msra.mxu0 0
      %386 = vmatprep.subr.bf16.mxu0 0
      %387 = vmatpush1.bf16.msra.mxu0 0
      %388 = vmatprep.subr.bf16.mxu0 0
      %389 = vmatpush1.bf16.msra.mxu0 0
      %390 = vmatprep.subr.bf16.mxu0 0
      %391 = vmatpush1.bf16.msra.mxu0 %v374
      %392 = vmatprep.subr.bf16.mxu0 0
      %393 = vmatpush2.bf16.msra.mxu0 0
      %394 = vmatprep.subr.bf16.mxu0 0
      %395 = vmatpush2.bf16.msra.mxu0 0
      %396 = vmatprep.subr.bf16.mxu0 0
      %397 = vmatpush2.bf16.msra.mxu0 0
      %398 = vmatprep.subr.bf16.mxu0 0
      %399 = vmatpush2.bf16.msra.mxu0 0
      %400 = vmatprep.subr.bf16.mxu0 0
      %401 = vmatpush2.bf16.msra.mxu0 0
      %402 = vmatprep.subr.bf16.mxu0 0
      %403 = vmatpush2.bf16.msra.mxu0 0
      %404 = vmatprep.subr.bf16.mxu0 0
      %405 = vmatpush2.bf16.msra.mxu0 0
      %406 = vmatprep.subr.bf16.mxu0 0
      %407 = vmatpush2.bf16.msra.mxu0 0
      %408 = vmatprep.mubr.bf16.mxu0 0
      %409 = vmatmul.mubr.bf16.gmra.mxu0 %v370
      %v410 = vpop.f32.mrf.mxu0
      %v411 = vadd.f32 0.0, %v410
      %v412 = vpop.f32.mrf.mxu0
      %v413 = vpop.f32.mrf.mxu0
      %v414 = vadd.f32 0.0, %v413
      %v415 = vpop.f32.mrf.mxu0
      %416 = vdwg.mxu0
      %v419 = vunpack.c.l.b16 %v348
      %v420 = vunpack.c.l.b16 %v350
      %v421 = vpack.c.b16 %v360, %v419
      %v422 = vpack.c.b16 %v420, %v420
      %vm423 = vcmask 1045504
      %v424 = vrot.slane %v421, 2
      %v425 = vrot.slane %v422, 2
      %v426 = vsel %vm423, %v424, %v425
      %v428 = vsel %vm368, %v426, 0
      %v431 = vsel %vm372, %v351, 0
      %433 = vmatprep.subr.bf16.mxu0 0
      %434 = vmatpush1.bf16.msra.mxu0 0
      %435 = vmatprep.subr.bf16.mxu0 0
      %436 = vmatpush1.bf16.msra.mxu0 0
      %437 = vmatprep.subr.bf16.mxu0 0
      %438 = vmatpush1.bf16.msra.mxu0 0
      %439 = vmatprep.subr.bf16.mxu0 0
      %440 = vmatpush1.bf16.msra.mxu0 0
      %441 = vmatprep.subr.bf16.mxu0 0
      %442 = vmatpush1.bf16.msra.mxu0 0
      %443 = vmatprep.subr.bf16.mxu0 0
      %444 = vmatpush1.bf16.msra.mxu0 0
      %445 = vmatprep.subr.bf16.mxu0 0
      %446 = vmatpush1.bf16.msra.mxu0 0
      %447 = vmatprep.subr.bf16.mxu0 0
      %448 = vmatpush1.bf16.msra.mxu0 %v431
      %449 = vmatprep.subr.bf16.mxu0 0
      %450 = vmatpush2.bf16.msra.mxu0 0
      %451 = vmatprep.subr.bf16.mxu0 0
      %452 = vmatpush2.bf16.msra.mxu0 0
      %453 = vmatprep.subr.bf16.mxu0 0
      %454 = vmatpush2.bf16.msra.mxu0 0
      %455 = vmatprep.subr.bf16.mxu0 0
      %456 = vmatpush2.bf16.msra.mxu0 0
      %457 = vmatprep.subr.bf16.mxu0 0
      %458 = vmatpush2.bf16.msra.mxu0 0
      %459 = vmatprep.subr.bf16.mxu0 0
      %460 = vmatpush2.bf16.msra.mxu0 0
      %461 = vmatprep.subr.bf16.mxu0 0
      %462 = vmatpush2.bf16.msra.mxu0 0
      %463 = vmatprep.subr.bf16.mxu0 0
      %464 = vmatpush2.bf16.msra.mxu0 0
      %465 = vmatprep.mubr.bf16.mxu0 0
      %466 = vmatmul.mubr.bf16.gmra.mxu0 %v428
      %v467 = vpop.f32.mrf.mxu0
      %v468 = vadd.f32 %v411, %v467
      %v469 = vpop.f32.mrf.mxu0
      %v470 = vpop.f32.mrf.mxu0
      %v471 = vadd.f32 %v414, %v470
      %v472 = vpop.f32.mrf.mxu0
      %473 = vdwg.mxu0
      %v474 = vld [vmem:[#allocation2 + $0xc] sm:$0xf]
      %s475 = scalar_lea.vmem %s1, 4
      %v476 = vld [vmem:[%s475] sm:$0x3]
      %v478 = vunpack.c.l.b16 %v474
      %v479 = vpack.c.b16 %v478, %v360
      %v481 = vsel %vm368, %v479, 0
      %v484 = vsel %vm372, %v476, 0
      %486 = vmatprep.subr.bf16.mxu0 0
      %487 = vmatpush1.bf16.msra.mxu0 0
      %488 = vmatprep.subr.bf16.mxu0 0
      %489 = vmatpush1.bf16.msra.mxu0 0
      %490 = vmatprep.subr.bf16.mxu0 0
      %491 = vmatpush1.bf16.msra.mxu0 0
      %492 = vmatprep.subr.bf16.mxu0 0
      %493 = vmatpush1.bf16.msra.mxu0 0
      %494 = vmatprep.subr.bf16.mxu0 0
      %495 = vmatpush1.bf16.msra.mxu0 0
      %496 = vmatprep.subr.bf16.mxu0 0
      %497 = vmatpush1.bf16.msra.mxu0 0
      %498 = vmatprep.subr.bf16.mxu0 0
      %499 = vmatpush1.bf16.msra.mxu0 0
      %500 = vmatprep.subr.bf16.mxu0 0
      %501 = vmatpush1.bf16.msra.mxu0 %v484
      %502 = vmatprep.subr.bf16.mxu0 0
      %503 = vmatpush2.bf16.msra.mxu0 0
      %504 = vmatprep.subr.bf16.mxu0 0
      %505 = vmatpush2.bf16.msra.mxu0 0
      %506 = vmatprep.subr.bf16.mxu0 0
      %507 = vmatpush2.bf16.msra.mxu0 0
      %508 = vmatprep.subr.bf16.mxu0 0
      %509 = vmatpush2.bf16.msra.mxu0 0
      %510 = vmatprep.subr.bf16.mxu0 0
      %511 = vmatpush2.bf16.msra.mxu0 0
      %512 = vmatprep.subr.bf16.mxu0 0
      %513 = vmatpush2.bf16.msra.mxu0 0
      %514 = vmatprep.subr.bf16.mxu0 0
      %515 = vmatpush2.bf16.msra.mxu0 0
      %516 = vmatprep.subr.bf16.mxu0 0
      %517 = vmatpush2.bf16.msra.mxu0 0
      %518 = vmatprep.mubr.bf16.mxu0 0
      %519 = vmatmul.mubr.bf16.gmra.mxu0 %v481
      %v520 = vpop.f32.mrf.mxu0
      %v521 = vadd.f32 0.0, %v520
      %v522 = vpop.f32.mrf.mxu0
      %v523 = vpop.f32.mrf.mxu0
      %v524 = vadd.f32 0.0, %v523
      %v525 = vpop.f32.mrf.mxu0
      %526 = vdwg.mxu0
      %v527 = vadd.f32 %v468, %v521
      %v528 = vadd.f32 %v471, %v524
      %v529 = vld [vmem:[%s2] sm:$0x1]
      %v531 = vlaneseq
      %v532 = vshrl.u32 %v531, 7
      %v533 = vsub.s32 0, %v532
      %v534 = vrot.slane %v529, %v533
      %v536 = vadd.f32 %v527, %v534
      %v537 = vadd.f32 %v528, %v534
      %v538 = vmax.f32 %v536, 0.0
      %v539 = vmax.f32 %v537, 0.0
      %v540 = vpack.c.bf16 %v539, %v538
      %v542 = vunpack.c.l.b16 %v540
      %v543 = vunpack.c.h.b16 %v540
      %v544 = vpack.c.b16 %v542, %v542
      %v545 = vpack.c.b16 %v543, %v543
      %vm548 = vcmask 60416
      %549 = vst.msk [vmem:[#allocation3 + $0x8] sm:$0xf] %vm548, %v544
      %550 = vst.msk [vmem:[#allocation3 + $0xc] sm:$0xf] %vm548, %v545
      %v551 = vld [vmem:[#allocation3 + $0x4] sm:$0xc]
      %v552 = vld [vmem:[#allocation3 + $0x8] sm:$0xf]
      %v553 = vld [vmem:[#allocation3 + $0xc] sm:$0x3]
      %v554 = vld [vmem:[%s3] sm:$0xf]
      %v555 = vld [vmem:[#allocation3 + $0x4] sm:$0x8]
      %v556 = vld [vmem:[#allocation3 + $0xc] sm:$0x7]
      %s557 = scalar_lea.vmem %s3, 4
      %v558 = vld [vmem:[%s557] sm:$0xf]
      %v562 = vunpack.c.l.b16 %v555
      %v563 = vunpack.c.l.b16 %v552
      %v564 = vunpack.c.l.b16 %v556
      %v565 = vpack.c.b16 %v563, %v562
      %v566 = vpack.c.b16 %v564, %v564
      %v567 = vrot.slane %v565, 3
      %v568 = vrot.slane %v566, 3
      %v569 = vsel %vm364, %v567, %v568
      %vm570 = vcmask 64512
      %v572 = vsel %vm570, %v569, 0
      %vm574 = vcmask 1043456
      %v576 = vsel %vm574, %v558, 0
      %578 = vmatprep.subr.bf16.mxu0 0
      %579 = vmatpush1.bf16.msra.mxu0 0
      %580 = vmatprep.subr.bf16.mxu0 0
      %581 = vmatpush1.bf16.msra.mxu0 0
      %582 = vmatprep.subr.bf16.mxu0 0
      %583 = vmatpush1.bf16.msra.mxu0 0
      %584 = vmatprep.subr.bf16.mxu0 0
      %585 = vmatpush1.bf16.msra.mxu0 0
      %586 = vmatprep.subr.bf16.mxu0 0
      %587 = vmatpush1.bf16.msra.mxu0 0
      %588 = vmatprep.subr.bf16.mxu0 0
      %589 = vmatpush1.bf16.msra.mxu0 0
      %590 = vmatprep.subr.bf16.mxu0 0
      %591 = vmatpush1.bf16.msra.mxu0 0
      %592 = vmatprep.subr.bf16.mxu0 0
      %593 = vmatpush1.bf16.msra.mxu0 %v576
      %594 = vmatprep.subr.bf16.mxu0 0
      %595 = vmatpush2.bf16.msra.mxu0 0
      %596 = vmatprep.subr.bf16.mxu0 0
      %597 = vmatpush2.bf16.msra.mxu0 0
      %598 = vmatprep.subr.bf16.mxu0 0
      %599 = vmatpush2.bf16.msra.mxu0 0
      %600 = vmatprep.subr.bf16.mxu0 0
      %601 = vmatpush2.bf16.msra.mxu0 0
      %602 = vmatprep.subr.bf16.mxu0 0
      %603 = vmatpush2.bf16.msra.mxu0 0
      %604 = vmatprep.subr.bf16.mxu0 0
      %605 = vmatpush2.bf16.msra.mxu0 0
      %606 = vmatprep.subr.bf16.mxu0 0
      %607 = vmatpush2.bf16.msra.mxu0 0
      %608 = vmatprep.subr.bf16.mxu0 0
      %609 = vmatpush2.bf16.msra.mxu0 0
      %610 = vmatprep.mubr.bf16.mxu0 0
      %611 = vmatmul.mubr.bf16.gmra.mxu0 %v572
      %v612 = vpop.f32.mrf.mxu0
      %v613 = vadd.f32 0.0, %v612
      %v614 = vpop.f32.mrf.mxu0
      %v615 = vpop.f32.mrf.mxu0
      %v616 = vadd.f32 0.0, %v615
      %v617 = vpop.f32.mrf.mxu0
      %618 = vdwg.mxu0
      %v621 = vunpack.c.l.b16 %v551
      %v622 = vunpack.c.l.b16 %v553
      %v623 = vpack.c.b16 %v563, %v621
      %v624 = vpack.c.b16 %v622, %v622
      %v625 = vrot.slane %v623, 2
      %v626 = vrot.slane %v624, 2
      %v627 = vsel %vm423, %v625, %v626
      %v629 = vsel %vm570, %v627, 0
      %v632 = vsel %vm574, %v554, 0
      %634 = vmatprep.subr.bf16.mxu0 0
      %635 = vmatpush1.bf16.msra.mxu0 0
      %636 = vmatprep.subr.bf16.mxu0 0
      %637 = vmatpush1.bf16.msra.mxu0 0
      %638 = vmatprep.subr.bf16.mxu0 0
      %639 = vmatpush1.bf16.msra.mxu0 0
      %640 = vmatprep.subr.bf16.mxu0 0
      %641 = vmatpush1.bf16.msra.mxu0 0
      %642 = vmatprep.subr.bf16.mxu0 0
      %643 = vmatpush1.bf16.msra.mxu0 0
      %644 = vmatprep.subr.bf16.mxu0 0
      %645 = vmatpush1.bf16.msra.mxu0 0
      %646 = vmatprep.subr.bf16.mxu0 0
      %647 = vmatpush1.bf16.msra.mxu0 0
      %648 = vmatprep.subr.bf16.mxu0 0
      %649 = vmatpush1.bf16.msra.mxu0 %v632
      %650 = vmatprep.subr.bf16.mxu0 0
      %651 = vmatpush2.bf16.msra.mxu0 0
      %652 = vmatprep.subr.bf16.mxu0 0
      %653 = vmatpush2.bf16.msra.mxu0 0
      %654 = vmatprep.subr.bf16.mxu0 0
      %655 = vmatpush2.bf16.msra.mxu0 0
      %656 = vmatprep.subr.bf16.mxu0 0
      %657 = vmatpush2.bf16.msra.mxu0 0
      %658 = vmatprep.subr.bf16.mxu0 0
      %659 = vmatpush2.bf16.msra.mxu0 0
      %660 = vmatprep.subr.bf16.mxu0 0
      %661 = vmatpush2.bf16.msra.mxu0 0
      %662 = vmatprep.subr.bf16.mxu0 0
      %663 = vmatpush2.bf16.msra.mxu0 0
      %664 = vmatprep.subr.bf16.mxu0 0
      %665 = vmatpush2.bf16.msra.mxu0 0
      %666 = vmatprep.mubr.bf16.mxu0 0
      %667 = vmatmul.mubr.bf16.gmra.mxu0 %v629
      %v668 = vpop.f32.mrf.mxu0
      %v669 = vadd.f32 %v613, %v668
      %v670 = vpop.f32.mrf.mxu0
      %v671 = vpop.f32.mrf.mxu0
      %v672 = vadd.f32 %v616, %v671
      %v673 = vpop.f32.mrf.mxu0
      %674 = vdwg.mxu0
      %v675 = vld [vmem:[#allocation3 + $0xc] sm:$0xf]
      %s676 = scalar_lea.vmem %s3, 8
      %v677 = vld [vmem:[%s676] sm:$0xf]
      %v679 = vunpack.c.l.b16 %v675
      %v680 = vpack.c.b16 %v679, %v563
      %v682 = vsel %vm570, %v680, 0
      %v685 = vsel %vm574, %v677, 0
      %687 = vmatprep.subr.bf16.mxu0 0
      %688 = vmatpush1.bf16.msra.mxu0 0
      %689 = vmatprep.subr.bf16.mxu0 0
      %690 = vmatpush1.bf16.msra.mxu0 0
      %691 = vmatprep.subr.bf16.mxu0 0
      %692 = vmatpush1.bf16.msra.mxu0 0
      %693 = vmatprep.subr.bf16.mxu0 0
      %694 = vmatpush1.bf16.msra.mxu0 0
      %695 = vmatprep.subr.bf16.mxu0 0
      %696 = vmatpush1.bf16.msra.mxu0 0
      %697 = vmatprep.subr.bf16.mxu0 0
      %698 = vmatpush1.bf16.msra.mxu0 0
      %699 = vmatprep.subr.bf16.mxu0 0
      %700 = vmatpush1.bf16.msra.mxu0 0
      %701 = vmatprep.subr.bf16.mxu0 0
      %702 = vmatpush1.bf16.msra.mxu0 %v685
      %703 = vmatprep.subr.bf16.mxu0 0
      %704 = vmatpush2.bf16.msra.mxu0 0
      %705 = vmatprep.subr.bf16.mxu0 0
      %706 = vmatpush2.bf16.msra.mxu0 0
      %707 = vmatprep.subr.bf16.mxu0 0
      %708 = vmatpush2.bf16.msra.mxu0 0
      %709 = vmatprep.subr.bf16.mxu0 0
      %710 = vmatpush2.bf16.msra.mxu0 0
      %711 = vmatprep.subr.bf16.mxu0 0
      %712 = vmatpush2.bf16.msra.mxu0 0
      %713 = vmatprep.subr.bf16.mxu0 0
      %714 = vmatpush2.bf16.msra.mxu0 0
      %715 = vmatprep.subr.bf16.mxu0 0
      %716 = vmatpush2.bf16.msra.mxu0 0
      %717 = vmatprep.subr.bf16.mxu0 0
      %718 = vmatpush2.bf16.msra.mxu0 0
      %719 = vmatprep.mubr.bf16.mxu0 0
      %720 = vmatmul.mubr.bf16.gmra.mxu0 %v682
      %v721 = vpop.f32.mrf.mxu0
      %v722 = vadd.f32 0.0, %v721
      %v723 = vpop.f32.mrf.mxu0
      %v724 = vpop.f32.mrf.mxu0
      %v725 = vadd.f32 0.0, %v724
      %v726 = vpop.f32.mrf.mxu0
      %727 = vdwg.mxu0
      %v728 = vadd.f32 %v669, %v722
      %v729 = vadd.f32 %v672, %v725
      %v730 = vld [vmem:[%s4] sm:$0x1]
      %v732 = vlaneseq
      %v733 = vshrl.u32 %v732, 7
      %v734 = vsub.s32 0, %v733
      %v735 = vrot.slane %v730, %v734
      %v737 = vadd.f32 %v728, %v735
      %v738 = vadd.f32 %v729, %v735
      %v739 = vmax.f32 %v737, 0.0
      %v740 = vmax.f32 %v738, 0.0
      %v741 = vld [vmem:[%s5] sm:$0x3]
      %v742 = vld [vmem:[%s6] sm:$0x1]
      %v744 = vlaneseq
      %v745 = vshrl.u32 %v744, 7
      %v746 = vsub.s32 0, %v745
      %v747 = vrot.slane %v742, %v746
      %v751 = vunpack.c.l.b16 %v343
      %v752 = vunpack.c.l.b16 %v344
      %v753 = vpack.c.b16 %v752, %v751
      %v755 = vsel %vm368, %v753, 0
      %v758 = vsel %vm372, %v741, 0
      %760 = vmatprep.subr.bf16.mxu0 0
      %761 = vmatpush1.bf16.msra.mxu0 0
      %762 = vmatprep.subr.bf16.mxu0 0
      %763 = vmatpush1.bf16.msra.mxu0 0
      %764 = vmatprep.subr.bf16.mxu0 0
      %765 = vmatpush1.bf16.msra.mxu0 0
      %766 = vmatprep.subr.bf16.mxu0 0
      %767 = vmatpush1.bf16.msra.mxu0 0
      %768 = vmatprep.subr.bf16.mxu0 0
      %769 = vmatpush1.bf16.msra.mxu0 0
      %770 = vmatprep.subr.bf16.mxu0 0
      %771 = vmatpush1.bf16.msra.mxu0 0
      %772 = vmatprep.subr.bf16.mxu0 0
      %773 = vmatpush1.bf16.msra.mxu0 0
      %774 = vmatprep.subr.bf16.mxu0 0
      %775 = vmatpush1.bf16.msra.mxu0 %v758
      %776 = vmatprep.subr.bf16.mxu0 0
      %777 = vmatpush2.bf16.msra.mxu0 0
      %778 = vmatprep.subr.bf16.mxu0 0
      %779 = vmatpush2.bf16.msra.mxu0 0
      %780 = vmatprep.subr.bf16.mxu0 0
      %781 = vmatpush2.bf16.msra.mxu0 0
      %782 = vmatprep.subr.bf16.mxu0 0
      %783 = vmatpush2.bf16.msra.mxu0 0
      %784 = vmatprep.subr.bf16.mxu0 0
      %785 = vmatpush2.bf16.msra.mxu0 0
      %786 = vmatprep.subr.bf16.mxu0 0
      %787 = vmatpush2.bf16.msra.mxu0 0
      %788 = vmatprep.subr.bf16.mxu0 0
      %789 = vmatpush2.bf16.msra.mxu0 0
      %790 = vmatprep.subr.bf16.mxu0 0
      %791 = vmatpush2.bf16.msra.mxu0 0
      %792 = vmatprep.mubr.bf16.mxu0 0
      %793 = vmatmul.mubr.bf16.gmra.mxu0 %v755
      %v794 = vpop.f32.mrf.mxu0
      %v795 = vadd.f32 %v747, %v794
      %v796 = vpop.f32.mrf.mxu0
      %v797 = vpop.f32.mrf.mxu0
      %v798 = vadd.f32 %v747, %v797
      %v799 = vpop.f32.mrf.mxu0
      %800 = vdwg.mxu0
      %v801 = vadd.f32 %v739, %v795
      %v802 = vadd.f32 %v740, %v798
      %v803 = vmax.f32 %v801, 0.0
      %v804 = vmax.f32 %v802, 0.0
      %805 = vst.msk [vmem:[%s316] sm:$0xff] %vm570, %v803
      %806 = vst.msk [vmem:[%s316 + $0x8] sm:$0xff] %vm570, %v804
      %s807 = smul.u32 2, %s23
      %p808 = scmp.lt.s32.totalorder %s22, 1
      %s809 = scalar_select %p808, %s22, 1
      %p810 = scmp.lt.s32.totalorder %s807, 1
      %s811 = scalar_select %p810, %s807, 1
      %s812 = smul.addr %s809, 2
      %s813 = sadd.s32 %s811, %s812
      %s814 = smul.addr %s813, 8
      %s815 = scalar_lea.vmem %s7, %s814
      // Predicated region
      $region57: #{tpu_custom_call.1} parent=47 // pred_check
        %p816 = pneg %p204
      $region58: #{tpu_custom_call.1} parent=47 // pred_check_branch
        %818 = sbr.rel (%p816) target = $region60
      $region59: #{tpu_custom_call.1} parent=47 // pred_region
        %s819 = smul.u32 2, %s23
      $region60: #{tpu_custom_call.1} parent=47 // pred_fallthru
        _
    $region48: #{tpu_custom_call.1} parent=5 // pred_fallthru
      _
    %p820 = scmp.le.s32.totalorder 2, %s13
    // Predicated region
    $region61: #{tpu_custom_call.1} parent=5 // pred_check
      %p821 = pneg %p820
    $region62: #{tpu_custom_call.1} parent=5 // pred_check_branch
      %823 = sbr.rel (%p821) target = $region64
    $region63: #{tpu_custom_call.1} parent=5 // pred_region
      %s824 = ssub.s32 %s13, 2
      // Predicated region
      $region65: #{tpu_custom_call.1} parent=63 // pred_check
        %p825 = pneg %p210
      $region66: #{tpu_custom_call.1} parent=63 // pred_check_branch
        %827 = sbr.rel (%p825) target = $region68
      $region67: #{tpu_custom_call.1} parent=63 // pred_region
        %s828 = smul.u32 2, %s25
        %p829 = scmp.lt.s32.totalorder %s24, 1
        %s830 = scalar_select %p829, %s24, 1
        %p831 = scmp.lt.s32.totalorder %s828, 1
        %s832 = scalar_select %p831, %s828, 1
        %s833 = smul.addr %s830, 2
        %s834 = sadd.s32 %s832, %s833
        %s835 = smul.addr %s834, 8
        %s836 = scalar_lea.vmem %s7, %s835
      $region68: #{tpu_custom_call.1} parent=63 // pred_fallthru
        _
    $region64: #{tpu_custom_call.1} parent=5 // pred_fallthru
      _
  $region6: #{tpu_custom_call.1} parent=0 // loop_footer
    %s17 = sadd.s32 1, %s13
  $region7: #{tpu_custom_call.1} parent=0 // loop_footer_branch
    %12 = sbr.rel target = $region3
  $region8: #{tpu_custom_call.1} parent=0 // loop_exit
    _

</llo_original>
